<compile_context>
chip_gen: v7x
topology: tpu7x:2x2x1
jax: 0.10.0
libtpu: 0.0.40
codegen_flags: <defaults>
</compile_context>

<pallas_src>
import jax
import jax.numpy as jnp
from jax import lax
from jax.experimental import pallas as pl
from jax.experimental.pallas import tpu as pltpu

K = 3            # kernel size
NEG_SLOPE = 0.135
LANE = 128


def _round_up(x, m):
    return (x + m - 1) // m * m


def _make_kernel(h, c_out, h_out, ol):
    """Build the kernel body for a fixed (static) geometry."""
    pb = K - 1                 # top/bottom pad rows
    cb = (K - 1) * c_out       # left pad in flattened lane units

    def kernel(x_ref, wl_ref, o_ref, pad_ref):
        # x_ref:   (N, H, W*C_out)      unpadded channels-last input (all batches)
        # wl_ref:  (K*K, OL)            flipped weights, lane-broadcast, zero-padded to OL
        # o_ref:   (N, H_out, OL)       lane-dense (multiple-of-128) output
        # pad_ref: (N, Hp, WPAD)        VMEM scratch used for in-kernel zero padding
        _, _, wc = x_ref.shape

        # In-kernel zero padding: zero the scratch once (single grid step), then
        # place the interior slab.  Padded lanes beyond the real data stay zero so
        # the padded output lanes compute to exactly 0.
        pad_ref[...] = jnp.zeros_like(pad_ref)
        pad_ref[:, pb:pb + h, cb:cb + wc] = x_ref[...]

        xp = pad_ref[...]
        wl = wl_ref[...]

        # Hoist the kx lane shifts out of the ky loop: 3 lane-shifted views
        # (lane offsets 0 / c_out / 2*c_out), built once.  The remaining slices
        # inside the loop are sublane-only.
        xs = [xp[:, :, kx * c_out: kx * c_out + ol] for kx in range(K)]

        # 9-tap correlation as shifted elementwise FMAs on the VPU.
        # One partial accumulator per ky row (shorter VALU dependence chain),
        # each initialized with its first product (no zero materialization).
        acc = []
        for ky in range(K):
            a = xs[0][:, ky:ky + h_out, :] * wl[ky * K]
            for kx in range(1, K):
                a = a + xs[kx][:, ky:ky + h_out, :] * wl[ky * K + kx]
            acc.append(a)
        y = (acc[0] + acc[1]) + acc[2]

        # x2 = y > 0 ; x3 = 0.135 * y ; out = where(x2, y, x3)
        # Full-width (lane-dense) unmasked store.
        o_ref[...] = jnp.where(y > 0, y, y * NEG_SLOPE).astype(o_ref.dtype)

    return kernel


def conv_transpose2d_leaky(x, weight, groups):
    """x: (N, C_in, H, W) f32; weight: (C_in, C_out//groups, K, K) (PyTorch layout)."""
    n, c_in, h, w = x.shape
    _, m_per_g, kh, kw = weight.shape
    assert kh == K and kw == K and c_in == groups      # one input channel per group
    c_out = groups * m_per_g
    h_out, w_out = h + K - 1, w + K - 1
    hp = h + 2 * (K - 1)

    woc = w_out * c_out                                # real output lane width (144)
    ol = _round_up(woc, LANE)                          # lane-dense output width (256)
    wpad = (K - 1) * c_out + ol                        # scratch lane width covering max tap shift

    # ---- wrapper-side layout plumbing (lane-dense channels-last packing) ----
    # Each output channel sees a copy of its group's (single) input channel.
    # TODO(synk): at the intended 377-group scale, fold the per-group replication
    # into the kernel instead of jnp.repeat to avoid multiplying input HBM traffic.
    x_rep = jnp.repeat(x, m_per_g, axis=1)                         # (N, C_out, H, W)
    x_cl = jnp.transpose(x_rep, (0, 2, 3, 1)).reshape(n, h, w * c_out)

    # Flipped per-output-channel weights as 9 lane vectors.  Reversing the flattened
    # 3x3 axis flips ky and kx simultaneously, so row r = ky*K+kx holds
    # weight[g, m, K-1-ky, K-1-kx] broadcast over the W_out lanes.  Zero-pad to OL so
    # the padded output lanes evaluate to 0.
    w_tab = weight.reshape(c_out, K * K)[:, ::-1]                  # (C_out, 9)
    w_lane = jnp.broadcast_to(w_tab.T[:, None, :], (K * K, w_out, c_out))
    w_lane = w_lane.reshape(K * K, woc)
    w_lane = jnp.pad(w_lane, ((0, 0), (0, ol - woc)))              # (9, OL)

    kernel = _make_kernel(h, c_out, h_out, ol)

    out_cl = pl.pallas_call(
        kernel,
        out_shape=jax.ShapeDtypeStruct((n, h_out, ol), x.dtype),
        grid=(1,),
        in_specs=[
            pl.BlockSpec((n, h, w * c_out), lambda i: (0, 0, 0)),
            pl.BlockSpec((K * K, ol), lambda i: (0, 0)),
        ],
        out_specs=pl.BlockSpec((n, h_out, ol), lambda i: (0, 0, 0)),
        scratch_shapes=[pltpu.VMEM((n, hp, wpad), jnp.float32)],
        compiler_params=pltpu.CompilerParams(
            dimension_semantics=("arbitrary",)),
    )(x_cl, w_lane)

    # Strip lane padding and go back to PyTorch NCHW.
    out_cl = out_cl[:, :, :woc]
    return out_cl.reshape(n, h_out, w_out, c_out).transpose(0, 3, 1, 2)


def _reference(x, weight, groups):
    """Pure-JAX reference using lax.conv_general_dilated on the padded input."""
    c_in, m_per_g, _, _ = weight.shape
    c_out = groups * m_per_g
    xpad = jnp.pad(x, ((0, 0), (0, 0), (K - 1, K - 1), (K - 1, K - 1)))
    w_flip = weight[:, :, ::-1, ::-1].reshape(c_out, 1, K, K)  # OIHW, I = C_in/groups = 1
    y = lax.conv_general_dilated(
        xpad, w_flip, window_strides=(1, 1), padding="VALID",
        dimension_numbers=("NCHW", "OIHW", "NCHW"),
        feature_group_count=groups)
    return jnp.where(y > 0, y, y * NEG_SLOPE)


if __name__ == "__main__":
    key = jax.random.PRNGKey(0)
    k_x, k_w = jax.random.split(key)

    N, C_IN, H, W = 2, 4, 16, 16
    GROUPS = 4
    M_PER_G = 2                      # out_channels = 8
    x = jax.random.normal(k_x, (N, C_IN, H, W), dtype=jnp.float32)
    weight = jax.random.normal(k_w, (C_IN, M_PER_G, K, K), dtype=jnp.float32) * 0.1

    out = conv_transpose2d_leaky(x, weight, GROUPS)
    out = jax.block_until_ready(out)

    ref = _reference(x, weight, GROUPS)
    assert out.shape == (N, GROUPS * M_PER_G, H + K - 1, W + K - 1)
    assert jnp.allclose(out, ref, atol=1e-5, rtol=1e-5)

    print("KERNEL_OK")
</pallas_src>

<mosaic_0001>
module attributes {stable_mosaic.version = 11 : i64} {
  func.func @kernel(%arg0: i32, %arg1: memref<2x16x128xf32, #tpu.memory_space<vmem>>, %arg2: memref<9x256xf32, #tpu.memory_space<vmem>>, %arg3: memref<2x18x256xf32, #tpu.memory_space<vmem>>, %arg4: memref<2x20x272xf32, #tpu.memory_space<vmem>>) attributes {dimension_semantics = [#tpu.dimension_semantics<arbitrary>], iteration_bounds = array<i64: 1>, scalar_prefetch = 0 : i64, scratch_operands = 1 : i64, tpu.core_type = #tpu.core_type<tc>, window_params = [{pipeline_mode = #tpu.pipeline_mode<synchronous>, transform_indices = @transform_0, window_bounds = array<i64: 2, 16, 128>}, {pipeline_mode = #tpu.pipeline_mode<synchronous>, transform_indices = @transform_1, window_bounds = array<i64: 9, 256>}, {pipeline_mode = #tpu.pipeline_mode<synchronous>, transform_indices = @transform_2, window_bounds = array<i64: 2, 18, 256>}]} {
    %cst = arith.constant 0.000000e+00 : f32
    %0 = vector.broadcast %cst : f32 to vector<2x20x272xf32>
    %c0 = arith.constant 0 : index
    %c0_0 = arith.constant 0 : index
    %c0_1 = arith.constant 0 : index
    %1 = vector.load %arg4[%c0, %c0_0, %c0_1] : memref<2x20x272xf32, #tpu.memory_space<vmem>>, vector<2x20x272xf32>
    tpu.vector_store %arg4[%c0, %c0_0, %c0_1], %0 {strides = array<i32>} : memref<2x20x272xf32, #tpu.memory_space<vmem>>, vector<2x20x272xf32>,
    %c0_2 = arith.constant 0 : index
    %c0_3 = arith.constant 0 : index
    %c0_4 = arith.constant 0 : index
    %2 = vector.load %arg1[%c0_2, %c0_3, %c0_4] : memref<2x16x128xf32, #tpu.memory_space<vmem>>, vector<2x16x128xf32>
    %c0_5 = arith.constant 0 : index
    %c2 = arith.constant 2 : index
    %c16 = arith.constant 16 : index
    %3 = vector.load %arg4[%c0_5, %c2, %c16] : memref<2x20x272xf32, #tpu.memory_space<vmem>>, vector<2x16x128xf32>
    tpu.vector_store %arg4[%c0_5, %c2, %c16], %2 {strides = array<i32>} : memref<2x20x272xf32, #tpu.memory_space<vmem>>, vector<2x16x128xf32>,
    %c0_6 = arith.constant 0 : index
    %c0_7 = arith.constant 0 : index
    %c0_8 = arith.constant 0 : index
    %4 = vector.load %arg4[%c0_6, %c0_7, %c0_8] : memref<2x20x272xf32, #tpu.memory_space<vmem>>, vector<2x20x272xf32>
    %c0_9 = arith.constant 0 : index
    %c0_10 = arith.constant 0 : index
    %5 = vector.load %arg2[%c0_9, %c0_10] : memref<9x256xf32, #tpu.memory_space<vmem>>, vector<9x256xf32>
    %6 = vector.extract_strided_slice %4 {offsets = [0, 0, 0], sizes = [2, 20, 256], strides = [1, 1, 1]} : vector<2x20x272xf32> to vector<2x20x256xf32>
    %7 = vector.extract_strided_slice %4 {offsets = [0, 0, 8], sizes = [2, 20, 256], strides = [1, 1, 1]} : vector<2x20x272xf32> to vector<2x20x256xf32>
    %8 = vector.extract_strided_slice %4 {offsets = [0, 0, 16], sizes = [2, 20, 256], strides = [1, 1, 1]} : vector<2x20x272xf32> to vector<2x20x256xf32>
    %9 = vector.extract_strided_slice %6 {offsets = [0, 0, 0], sizes = [2, 18, 256], strides = [1, 1, 1]} : vector<2x20x256xf32> to vector<2x18x256xf32>
    %10 = vector.extract_strided_slice %5 {offsets = [0, 0], sizes = [1, 256], strides = [1, 1]} : vector<9x256xf32> to vector<1x256xf32>
    %11 = vector.shape_cast %10 : vector<1x256xf32> to vector<256xf32>
    %12 = vector.shape_cast %11 : vector<256xf32> to vector<1x1x256xf32>
    %13 = vector.broadcast %12 : vector<1x1x256xf32> to vector<2x18x256xf32>
    %14 = arith.mulf %9, %13 : vector<2x18x256xf32>
    %15 = vector.extract_strided_slice %7 {offsets = [0, 0, 0], sizes = [2, 18, 256], strides = [1, 1, 1]} : vector<2x20x256xf32> to vector<2x18x256xf32>
    %16 = vector.extract_strided_slice %5 {offsets = [1, 0], sizes = [1, 256], strides = [1, 1]} : vector<9x256xf32> to vector<1x256xf32>
    %17 = vector.shape_cast %16 : vector<1x256xf32> to vector<256xf32>
    %18 = vector.shape_cast %17 : vector<256xf32> to vector<1x1x256xf32>
    %19 = vector.broadcast %18 : vector<1x1x256xf32> to vector<2x18x256xf32>
    %20 = arith.mulf %15, %19 : vector<2x18x256xf32>
    %21 = arith.addf %14, %20 : vector<2x18x256xf32>
    %22 = vector.extract_strided_slice %8 {offsets = [0, 0, 0], sizes = [2, 18, 256], strides = [1, 1, 1]} : vector<2x20x256xf32> to vector<2x18x256xf32>
    %23 = vector.extract_strided_slice %5 {offsets = [2, 0], sizes = [1, 256], strides = [1, 1]} : vector<9x256xf32> to vector<1x256xf32>
    %24 = vector.shape_cast %23 : vector<1x256xf32> to vector<256xf32>
    %25 = vector.shape_cast %24 : vector<256xf32> to vector<1x1x256xf32>
    %26 = vector.broadcast %25 : vector<1x1x256xf32> to vector<2x18x256xf32>
    %27 = arith.mulf %22, %26 : vector<2x18x256xf32>
    %28 = arith.addf %21, %27 : vector<2x18x256xf32>
    %29 = vector.extract_strided_slice %6 {offsets = [0, 1, 0], sizes = [2, 18, 256], strides = [1, 1, 1]} : vector<2x20x256xf32> to vector<2x18x256xf32>
    %30 = vector.extract_strided_slice %5 {offsets = [3, 0], sizes = [1, 256], strides = [1, 1]} : vector<9x256xf32> to vector<1x256xf32>
    %31 = vector.shape_cast %30 : vector<1x256xf32> to vector<256xf32>
    %32 = vector.shape_cast %31 : vector<256xf32> to vector<1x1x256xf32>
    %33 = vector.broadcast %32 : vector<1x1x256xf32> to vector<2x18x256xf32>
    %34 = arith.mulf %29, %33 : vector<2x18x256xf32>
    %35 = vector.extract_strided_slice %7 {offsets = [0, 1, 0], sizes = [2, 18, 256], strides = [1, 1, 1]} : vector<2x20x256xf32> to vector<2x18x256xf32>
    %36 = vector.extract_strided_slice %5 {offsets = [4, 0], sizes = [1, 256], strides = [1, 1]} : vector<9x256xf32> to vector<1x256xf32>
    %37 = vector.shape_cast %36 : vector<1x256xf32> to vector<256xf32>
    %38 = vector.shape_cast %37 : vector<256xf32> to vector<1x1x256xf32>
    %39 = vector.broadcast %38 : vector<1x1x256xf32> to vector<2x18x256xf32>
    %40 = arith.mulf %35, %39 : vector<2x18x256xf32>
    %41 = arith.addf %34, %40 : vector<2x18x256xf32>
    %42 = vector.extract_strided_slice %8 {offsets = [0, 1, 0], sizes = [2, 18, 256], strides = [1, 1, 1]} : vector<2x20x256xf32> to vector<2x18x256xf32>
    %43 = vector.extract_strided_slice %5 {offsets = [5, 0], sizes = [1, 256], strides = [1, 1]} : vector<9x256xf32> to vector<1x256xf32>
    %44 = vector.shape_cast %43 : vector<1x256xf32> to vector<256xf32>
    %45 = vector.shape_cast %44 : vector<256xf32> to vector<1x1x256xf32>
    %46 = vector.broadcast %45 : vector<1x1x256xf32> to vector<2x18x256xf32>
    %47 = arith.mulf %42, %46 : vector<2x18x256xf32>
    %48 = arith.addf %41, %47 : vector<2x18x256xf32>
    %49 = vector.extract_strided_slice %6 {offsets = [0, 2, 0], sizes = [2, 18, 256], strides = [1, 1, 1]} : vector<2x20x256xf32> to vector<2x18x256xf32>
    %50 = vector.extract_strided_slice %5 {offsets = [6, 0], sizes = [1, 256], strides = [1, 1]} : vector<9x256xf32> to vector<1x256xf32>
    %51 = vector.shape_cast %50 : vector<1x256xf32> to vector<256xf32>
    %52 = vector.shape_cast %51 : vector<256xf32> to vector<1x1x256xf32>
    %53 = vector.broadcast %52 : vector<1x1x256xf32> to vector<2x18x256xf32>
    %54 = arith.mulf %49, %53 : vector<2x18x256xf32>
    %55 = vector.extract_strided_slice %7 {offsets = [0, 2, 0], sizes = [2, 18, 256], strides = [1, 1, 1]} : vector<2x20x256xf32> to vector<2x18x256xf32>
    %56 = vector.extract_strided_slice %5 {offsets = [7, 0], sizes = [1, 256], strides = [1, 1]} : vector<9x256xf32> to vector<1x256xf32>
    %57 = vector.shape_cast %56 : vector<1x256xf32> to vector<256xf32>
    %58 = vector.shape_cast %57 : vector<256xf32> to vector<1x1x256xf32>
    %59 = vector.broadcast %58 : vector<1x1x256xf32> to vector<2x18x256xf32>
    %60 = arith.mulf %55, %59 : vector<2x18x256xf32>
    %61 = arith.addf %54, %60 : vector<2x18x256xf32>
    %62 = vector.extract_strided_slice %8 {offsets = [0, 2, 0], sizes = [2, 18, 256], strides = [1, 1, 1]} : vector<2x20x256xf32> to vector<2x18x256xf32>
    %63 = vector.extract_strided_slice %5 {offsets = [8, 0], sizes = [1, 256], strides = [1, 1]} : vector<9x256xf32> to vector<1x256xf32>
    %64 = vector.shape_cast %63 : vector<1x256xf32> to vector<256xf32>
    %65 = vector.shape_cast %64 : vector<256xf32> to vector<1x1x256xf32>
    %66 = vector.broadcast %65 : vector<1x1x256xf32> to vector<2x18x256xf32>
    %67 = arith.mulf %62, %66 : vector<2x18x256xf32>
    %68 = arith.addf %61, %67 : vector<2x18x256xf32>
    %69 = arith.addf %28, %48 : vector<2x18x256xf32>
    %70 = arith.addf %69, %68 : vector<2x18x256xf32>
    %cst_11 = arith.constant 0.000000e+00 : f32
    %71 = vector.broadcast %cst_11 : f32 to vector<2x18x256xf32>
    %72 = arith.cmpf ogt, %70, %71 : vector<2x18x256xf32>
    %cst_12 = arith.constant 1.350000e-01 : f32
    %73 = vector.broadcast %cst_12 : f32 to vector<2x18x256xf32>
    %74 = arith.mulf %70, %73 : vector<2x18x256xf32>
    %75 = arith.select %72, %70, %74 : vector<2x18x256xi1>, vector<2x18x256xf32>
    %c0_13 = arith.constant 0 : index
    %c0_14 = arith.constant 0 : index
    %c0_15 = arith.constant 0 : index
    %76 = vector.load %arg3[%c0_13, %c0_14, %c0_15] : memref<2x18x256xf32, #tpu.memory_space<vmem>>, vector<2x18x256xf32>
    tpu.vector_store %arg3[%c0_13, %c0_14, %c0_15], %75 {strides = array<i32>} : memref<2x18x256xf32, #tpu.memory_space<vmem>>, vector<2x18x256xf32>,
    return
  }
  func.func @transform_0(%arg0: i32) -> (i32, i32, i32) {
    %c0_i32 = arith.constant 0 : i32
    %c0_i32_0 = arith.constant 0 : i32
    %c0_i32_1 = arith.constant 0 : i32
    %c0_i32_2 = arith.constant 0 : i32
    return %c0_i32, %c0_i32_0, %c0_i32_1 : i32, i32, i32
  }
  func.func @transform_1(%arg0: i32) -> (i32, i32) {
    %c0_i32 = arith.constant 0 : i32
    %c0_i32_0 = arith.constant 0 : i32
    %c0_i32_1 = arith.constant 0 : i32
    return %c0_i32, %c0_i32_0 : i32, i32
  }
  func.func @transform_2(%arg0: i32) -> (i32, i32, i32) {
    %c0_i32 = arith.constant 0 : i32
    %c0_i32_0 = arith.constant 0 : i32
    %c0_i32_1 = arith.constant 0 : i32
    %c0_i32_2 = arith.constant 0 : i32
    return %c0_i32, %c0_i32_0, %c0_i32_1 : i32, i32, i32
  }
}

</mosaic_0001>

<llo_original>
// kernel: tpu_custom_call.1
$region0: #{tpu_custom_call.1}
  #allocation0 [shape = 'u32[]', space=smem, size = 0x4, offset = 0x4, fixed_abs, tag = 'smem constant byte address 0x4 - core index']
  #allocation1 [shape = 'u32[144,128]{1,0:T(1,128)}', space=vmem, size = 0x12000, scoped, tag = 'internal scratch']
  #allocation2 [shape = 'f32[2,20,272]{2,1,0:T(8,128)}', space=vmem, size = 0x12000, scoped, tag = 'scratch operand']
  %s0 = inlined_call_operand.hbm [shape: f32[2,16,128], index: 0, kind: input, shape index: {}]
  %s1 = inlined_call_operand.hbm [shape: f32[9,256], index: 1, kind: input, shape index: {}]
  %s2 = inlined_call_operand.vmem [shape: f32[2,18,256], index: 2, kind: output, shape index: {}]
  %s3 = sld [smem:[#allocation0]]
  $region26: #{tpu_custom_call.1} parent=0
    _
  %s5 = ssub.s32 1, %s3
  %s6 = scalar_select 0, %s5, %s3
  $region1: #{tpu_custom_call.1} parent=0
    #allocation3 [shape = 'u8[16384]{0}', space=vmem, size = 0x4000, scoped, tag = 'input window, operand 0, single buffered']
    #allocation4 [shape = 's32[1]{0}', space=sflag, size = 0x4, scoped, tag = 'scoped memory for tpu_custom_call.1']
    #allocation5 [shape = 'u8[16384]{0}', space=vmem, size = 0x4000, scoped, tag = 'input window, operand 1, single buffered']
    #allocation6 [shape = 's32[1]{0}', space=sflag, size = 0x4, scoped, tag = 'scoped memory for tpu_custom_call.1']
    %7 = vsyncpa [#allocation4], 0
    %8 = vsyncpa [#allocation6], 0
    // Predicated region
    $region2: #{tpu_custom_call.1} parent=1 // pred_check
      _
    $region3: #{tpu_custom_call.1} parent=1 // pred_check_branch
      %10 = sbr.rel (0) target = $region5
    $region4: #{tpu_custom_call.1} parent=1 // pred_region
      %s12 = ssub.s32 512, 512
      %13 = vsyncadd [#allocation4], %s12
      %s14 = sshll.u32 [#allocation3], 4
      %s15 = int_to_ptr.vmem [resolvable:$true] %s14
      %20 = dma.hbm_to_vmem [thread:$0]  %s0, 512, %s15, [#allocation4], 128, 128, 8
    $region5: #{tpu_custom_call.1} parent=1 // pred_fallthru
      _
    // Predicated region
    $region6: #{tpu_custom_call.1} parent=1 // pred_check
      _
    $region7: #{tpu_custom_call.1} parent=1 // pred_check_branch
      %22 = sbr.rel (0) target = $region9
    $region8: #{tpu_custom_call.1} parent=1 // pred_region
      %s24 = ssub.s32 512, 512
      %25 = vsyncadd [#allocation6], %s24
      %s26 = sshll.u32 [#allocation5], 4
      %s27 = int_to_ptr.vmem [resolvable:$true] %s26
      %32 = dma.hbm_to_vmem [thread:$0]  %s1, 512, %s27, [#allocation6], 256, 256, 16
    $region9: #{tpu_custom_call.1} parent=1 // pred_fallthru
      _
    // Predicated region
    $region10: #{tpu_custom_call.1} parent=1 // pred_check
      _
    $region11: #{tpu_custom_call.1} parent=1 // pred_check_branch
      %34 = sbr.rel (0) target = $region13
    $region12: #{tpu_custom_call.1} parent=1 // pred_region
      %35 = dma.done [#allocation4], 512
    $region13: #{tpu_custom_call.1} parent=1 // pred_fallthru
      _
    // Predicated region
    $region14: #{tpu_custom_call.1} parent=1 // pred_check
      _
    $region15: #{tpu_custom_call.1} parent=1 // pred_check_branch
      %37 = sbr.rel (0) target = $region17
    $region16: #{tpu_custom_call.1} parent=1 // pred_region
      %38 = dma.done [#allocation6], 512
    $region17: #{tpu_custom_call.1} parent=1 // pred_fallthru
      _
    %39 = vst [vmem:[#allocation2] sm:$0xff] 0.0
    %40 = vst [vmem:[#allocation2 + $0x8] sm:$0xff] 0.0
    %vm41 = vcmask 130048
    %42 = vst.msk [vmem:[#allocation2 + $0x10] sm:$0xff] %vm41, 0.0
    %43 = vst [vmem:[#allocation2 + $0x18] sm:$0xff] 0.0
    %44 = vst [vmem:[#allocation2 + $0x20] sm:$0xff] 0.0
    %45 = vst.msk [vmem:[#allocation2 + $0x28] sm:$0xff] %vm41, 0.0
    %46 = vst [vmem:[#allocation2 + $0x30] sm:$0xf] 0.0
    %47 = vst [vmem:[#allocation2 + $0x38] sm:$0xf] 0.0
    %vm48 = vcmask 125952
    %49 = vst.msk [vmem:[#allocation2 + $0x40] sm:$0xf] %vm48, 0.0
    %50 = vst [vmem:[#allocation2 + $0x48] sm:$0xff] 0.0
    %51 = vst [vmem:[#allocation2 + $0x50] sm:$0xff] 0.0
    %52 = vst.msk [vmem:[#allocation2 + $0x58] sm:$0xff] %vm41, 0.0
    %53 = vst [vmem:[#allocation2 + $0x60] sm:$0xff] 0.0
    %54 = vst [vmem:[#allocation2 + $0x68] sm:$0xff] 0.0
    %55 = vst.msk [vmem:[#allocation2 + $0x70] sm:$0xff] %vm41, 0.0
    %56 = vst [vmem:[#allocation2 + $0x78] sm:$0xf] 0.0
    %57 = vst [vmem:[#allocation2 + $0x80] sm:$0xf] 0.0
    %58 = vst.msk [vmem:[#allocation2 + $0x88] sm:$0xf] %vm48, 0.0
    %v59 = vld [vmem:[#allocation3] sm:$0xff]
    %v60 = vld [vmem:[#allocation3 + $0x8] sm:$0xff]
    %v61 = vld [vmem:[#allocation3 + $0x10] sm:$0xff]
    %v62 = vld [vmem:[#allocation3 + $0x18] sm:$0xff]
    %vm67 = vcmask 1041408
    %v68 = vrot.slane %v59, 6
    %v69 = vrot.slane %v60, 6
    %v70 = vsel %vm67, %v68, %v69
    %v71 = vrot.slane %v61, 6
    %v72 = vrot.slane %v62, 6
    %v73 = vsel %vm67, %v71, %v72
    %74 = vrot.lane.b32.xlu0 %v68, 16
    %v75 = vpop.permute.xlu0 %74
    %76 = vrot.lane.b32.xlu0 %v70, 16
    %v77 = vpop.permute.xlu0 %76
    %78 = vrot.lane.b32.xlu0 %v69, 16
    %v79 = vpop.permute.xlu0 %78
    %80 = vrot.lane.b32.xlu0 %v71, 16
    %v81 = vpop.permute.xlu0 %80
    %82 = vrot.lane.b32.xlu0 %v73, 16
    %v83 = vpop.permute.xlu0 %82
    %84 = vrot.lane.b32.xlu0 %v72, 16
    %v85 = vpop.permute.xlu0 %84
    %vm92 = vcmask 1047682
    %93 = vst.msk [vmem:[#allocation2] sm:$0xfc] %vm92, %v75
    %vm94 = vcmask 130050
    %95 = vst.msk [vmem:[#allocation2 + $0x8] sm:$0xfc] %vm94, %v75
    %vm96 = vcmask 1047680
    %97 = vst.msk [vmem:[#allocation2 + $0x18] sm:$0xff] %vm96, %v77
    %98 = vst.msk [vmem:[#allocation2 + $0x20] sm:$0xff] %vm41, %v77
    %vm99 = vcmask 1041536
    %100 = vst.msk [vmem:[#allocation2 + $0x30] sm:$0x3] %vm99, %v79
    %vm101 = vcmask 123904
    %102 = vst.msk [vmem:[#allocation2 + $0x38] sm:$0x3] %vm101, %v79
    %103 = vst.msk [vmem:[#allocation2 + $0x48] sm:$0xfc] %vm92, %v81
    %104 = vst.msk [vmem:[#allocation2 + $0x50] sm:$0xfc] %vm94, %v81
    %105 = vst.msk [vmem:[#allocation2 + $0x60] sm:$0xff] %vm96, %v83
    %106 = vst.msk [vmem:[#allocation2 + $0x68] sm:$0xff] %vm41, %v83
    %107 = vst.msk [vmem:[#allocation2 + $0x78] sm:$0x3] %vm99, %v85
    %108 = vst.msk [vmem:[#allocation2 + $0x80] sm:$0x3] %vm101, %v85
    %v109 = vld [vmem:[#allocation2] sm:$0xff]
    %v110 = vld [vmem:[#allocation2 + $0x8] sm:$0xff]
    %v111 = vld [vmem:[#allocation2 + $0x10] sm:$0xff]
    %v112 = vld [vmem:[#allocation2 + $0x18] sm:$0xff]
    %v113 = vld [vmem:[#allocation2 + $0x20] sm:$0xff]
    %v114 = vld [vmem:[#allocation2 + $0x28] sm:$0xff]
    %v115 = vld [vmem:[#allocation2 + $0x30] sm:$0xf]
    %v116 = vld [vmem:[#allocation2 + $0x38] sm:$0xf]
    %v117 = vld [vmem:[#allocation2 + $0x40] sm:$0xf]
    %v118 = vld [vmem:[#allocation2 + $0x48] sm:$0xff]
    %v119 = vld [vmem:[#allocation2 + $0x50] sm:$0xff]
    %v120 = vld [vmem:[#allocation2 + $0x58] sm:$0xff]
    %v121 = vld [vmem:[#allocation2 + $0x60] sm:$0xff]
    %v122 = vld [vmem:[#allocation2 + $0x68] sm:$0xff]
    %v123 = vld [vmem:[#allocation2 + $0x70] sm:$0xff]
    %v124 = vld [vmem:[#allocation2 + $0x78] sm:$0xf]
    %v125 = vld [vmem:[#allocation2 + $0x80] sm:$0xf]
    %v126 = vld [vmem:[#allocation2 + $0x88] sm:$0xf]
    %v127 = vld [vmem:[#allocation5] sm:$0xff]
    %v128 = vld [vmem:[#allocation5 + $0x8] sm:$0xff]
    %v129 = vld [vmem:[#allocation5 + $0x10] sm:$0x1]
    %v130 = vld [vmem:[#allocation5 + $0x18] sm:$0x1]
    %v131 = vlaneseq
    %v132 = vshrl.u32 %v131, 7
    %v133 = vsub.s32 0, %v132
    %v134 = vrot.slane %v127, %v133
    %v135 = vlaneseq
    %v136 = vshrl.u32 %v135, 7
    %v137 = vsub.s32 0, %v136
    %v138 = vrot.slane %v128, %v137
    %v139 = vmul.f32 %v109, %v134
    %v140 = vmul.f32 %v110, %v138
    %v141 = vmul.f32 %v112, %v134
    %v142 = vmul.f32 %v113, %v138
    %v143 = vmul.f32 %v115, %v134
    %v144 = vmul.f32 %v116, %v138
    %v145 = vmul.f32 %v118, %v134
    %v146 = vmul.f32 %v119, %v138
    %v147 = vmul.f32 %v121, %v134
    %v148 = vmul.f32 %v122, %v138
    %v149 = vmul.f32 %v124, %v134
    %v150 = vmul.f32 %v125, %v138
    %v151 = vlaneseq
    %v152 = vshrl.u32 %v151, 7
    %v153 = vsub.s32 1, %v152
    %v154 = vrot.slane %v127, %v153
    %v155 = vlaneseq
    %v156 = vshrl.u32 %v155, 7
    %v157 = vsub.s32 1, %v156
    %v158 = vrot.slane %v128, %v157
    %161 = vrot.lane.b32.xlu0 %v154, 8
    %v162 = vpop.permute.xlu0 %161
    %163 = vrot.lane.b32.xlu0 %v158, 8
    %v164 = vpop.permute.xlu0 %163
    %vm165 = vcmask 64512
    %v166 = vsel %vm165, %v162, %v164
    %v170 = vmul.f32 %v109, %v162
    %v171 = vmul.f32 %v110, %v166
    %v172 = vmul.f32 %v111, %v164
    %v173 = vmul.f32 %v112, %v162
    %v174 = vmul.f32 %v113, %v166
    %v175 = vmul.f32 %v114, %v164
    %v176 = vmul.f32 %v115, %v162
    %v177 = vmul.f32 %v116, %v166
    %v178 = vmul.f32 %v117, %v164
    %v179 = vmul.f32 %v118, %v162
    %v180 = vmul.f32 %v119, %v166
    %v181 = vmul.f32 %v120, %v164
    %v182 = vmul.f32 %v121, %v162
    %v183 = vmul.f32 %v122, %v166
    %v184 = vmul.f32 %v123, %v164
    %v185 = vmul.f32 %v124, %v162
    %v186 = vmul.f32 %v125, %v166
    %v187 = vmul.f32 %v126, %v164
    %206 = vrot.lane.b32.xlu0 %v170, 120
    %v207 = vpop.permute.xlu0 %206
    %208 = vrot.lane.b32.xlu0 %v171, 120
    %v209 = vpop.permute.xlu0 %208
    %210 = vrot.lane.b32.xlu0 %v172, 120
    %v211 = vpop.permute.xlu0 %210
    %212 = vrot.lane.b32.xlu0 %v173, 120
    %v213 = vpop.permute.xlu0 %212
    %214 = vrot.lane.b32.xlu0 %v174, 120
    %v215 = vpop.permute.xlu0 %214
    %216 = vrot.lane.b32.xlu0 %v175, 120
    %v217 = vpop.permute.xlu0 %216
    %218 = vrot.lane.b32.xlu0 %v176, 120
    %v219 = vpop.permute.xlu0 %218
    %220 = vrot.lane.b32.xlu0 %v177, 120
    %v221 = vpop.permute.xlu0 %220
    %222 = vrot.lane.b32.xlu0 %v178, 120
    %v223 = vpop.permute.xlu0 %222
    %224 = vrot.lane.b32.xlu0 %v179, 120
    %v225 = vpop.permute.xlu0 %224
    %226 = vrot.lane.b32.xlu0 %v180, 120
    %v227 = vpop.permute.xlu0 %226
    %228 = vrot.lane.b32.xlu0 %v181, 120
    %v229 = vpop.permute.xlu0 %228
    %230 = vrot.lane.b32.xlu0 %v182, 120
    %v231 = vpop.permute.xlu0 %230
    %232 = vrot.lane.b32.xlu0 %v183, 120
    %v233 = vpop.permute.xlu0 %232
    %234 = vrot.lane.b32.xlu0 %v184, 120
    %v235 = vpop.permute.xlu0 %234
    %236 = vrot.lane.b32.xlu0 %v185, 120
    %v237 = vpop.permute.xlu0 %236
    %238 = vrot.lane.b32.xlu0 %v186, 120
    %v239 = vpop.permute.xlu0 %238
    %240 = vrot.lane.b32.xlu0 %v187, 120
    %v241 = vpop.permute.xlu0 %240
    %vm242 = vcmask 982016
    %v243 = vsel %vm242, %v207, %v209
    %v244 = vsel %vm242, %v209, %v211
    %v245 = vsel %vm242, %v213, %v215
    %v246 = vsel %vm242, %v215, %v217
    %v247 = vsel %vm242, %v219, %v221
    %v248 = vsel %vm242, %v221, %v223
    %v249 = vsel %vm242, %v225, %v227
    %v250 = vsel %vm242, %v227, %v229
    %v251 = vsel %vm242, %v231, %v233
    %v252 = vsel %vm242, %v233, %v235
    %v253 = vsel %vm242, %v237, %v239
    %v254 = vsel %vm242, %v239, %v241
    %v267 = vadd.f32 %v139, %v243
    %v268 = vadd.f32 %v140, %v244
    %v269 = vadd.f32 %v141, %v245
    %v270 = vadd.f32 %v142, %v246
    %v271 = vadd.f32 %v143, %v247
    %v272 = vadd.f32 %v144, %v248
    %v273 = vadd.f32 %v145, %v249
    %v274 = vadd.f32 %v146, %v250
    %v275 = vadd.f32 %v147, %v251
    %v276 = vadd.f32 %v148, %v252
    %v277 = vadd.f32 %v149, %v253
    %v278 = vadd.f32 %v150, %v254
    %v279 = vlaneseq
    %v280 = vshrl.u32 %v279, 7
    %v281 = vsub.s32 2, %v280
    %v282 = vrot.slane %v127, %v281
    %v283 = vlaneseq
    %v284 = vshrl.u32 %v283, 7
    %v285 = vsub.s32 2, %v284
    %v286 = vrot.slane %v128, %v285
    %289 = vrot.lane.b32.xlu0 %v282, 16
    %v290 = vpop.permute.xlu0 %289
    %291 = vrot.lane.b32.xlu0 %v286, 16
    %v292 = vpop.permute.xlu0 %291
    %v293 = vsel %vm41, %v290, %v292
    %v297 = vmul.f32 %v109, %v290
    %v298 = vmul.f32 %v110, %v293
    %v299 = vmul.f32 %v111, %v292
    %v300 = vmul.f32 %v112, %v290
    %v301 = vmul.f32 %v113, %v293
    %v302 = vmul.f32 %v114, %v292
    %v303 = vmul.f32 %v115, %v290
    %v304 = vmul.f32 %v116, %v293
    %v305 = vmul.f32 %v117, %v292
    %v306 = vmul.f32 %v118, %v290
    %v307 = vmul.f32 %v119, %v293
    %v308 = vmul.f32 %v120, %v292
    %v309 = vmul.f32 %v121, %v290
    %v310 = vmul.f32 %v122, %v293
    %v311 = vmul.f32 %v123, %v292
    %v312 = vmul.f32 %v124, %v290
    %v313 = vmul.f32 %v125, %v293
    %v314 = vmul.f32 %v126, %v292
    %333 = vrot.lane.b32.xlu0 %v297, 112
    %v334 = vpop.permute.xlu0 %333
    %335 = vrot.lane.b32.xlu0 %v298, 112
    %v336 = vpop.permute.xlu0 %335
    %337 = vrot.lane.b32.xlu0 %v299, 112
    %v338 = vpop.permute.xlu0 %337
    %339 = vrot.lane.b32.xlu0 %v300, 112
    %v340 = vpop.permute.xlu0 %339
    %341 = vrot.lane.b32.xlu0 %v301, 112
    %v342 = vpop.permute.xlu0 %341
    %343 = vrot.lane.b32.xlu0 %v302, 112
    %v344 = vpop.permute.xlu0 %343
    %345 = vrot.lane.b32.xlu0 %v303, 112
    %v346 = vpop.permute.xlu0 %345
    %347 = vrot.lane.b32.xlu0 %v304, 112
    %v348 = vpop.permute.xlu0 %347
    %349 = vrot.lane.b32.xlu0 %v305, 112
    %v350 = vpop.permute.xlu0 %349
    %351 = vrot.lane.b32.xlu0 %v306, 112
    %v352 = vpop.permute.xlu0 %351
    %353 = vrot.lane.b32.xlu0 %v307, 112
    %v354 = vpop.permute.xlu0 %353
    %355 = vrot.lane.b32.xlu0 %v308, 112
    %v356 = vpop.permute.xlu0 %355
    %357 = vrot.lane.b32.xlu0 %v309, 112
    %v358 = vpop.permute.xlu0 %357
    %359 = vrot.lane.b32.xlu0 %v310, 112
    %v360 = vpop.permute.xlu0 %359
    %361 = vrot.lane.b32.xlu0 %v311, 112
    %v362 = vpop.permute.xlu0 %361
    %363 = vrot.lane.b32.xlu0 %v312, 112
    %v364 = vpop.permute.xlu0 %363
    %365 = vrot.lane.b32.xlu0 %v313, 112
    %v366 = vpop.permute.xlu0 %365
    %367 = vrot.lane.b32.xlu0 %v314, 112
    %v368 = vpop.permute.xlu0 %367
    %vm369 = vcmask 916480
    %v370 = vsel %vm369, %v334, %v336
    %v371 = vsel %vm369, %v336, %v338
    %v372 = vsel %vm369, %v340, %v342
    %v373 = vsel %vm369, %v342, %v344
    %v374 = vsel %vm369, %v346, %v348
    %v375 = vsel %vm369, %v348, %v350
    %v376 = vsel %vm369, %v352, %v354
    %v377 = vsel %vm369, %v354, %v356
    %v378 = vsel %vm369, %v358, %v360
    %v379 = vsel %vm369, %v360, %v362
    %v380 = vsel %vm369, %v364, %v366
    %v381 = vsel %vm369, %v366, %v368
    %v394 = vadd.f32 %v267, %v370
    %v395 = vadd.f32 %v268, %v371
    %v396 = vadd.f32 %v269, %v372
    %v397 = vadd.f32 %v270, %v373
    %v398 = vadd.f32 %v271, %v374
    %v399 = vadd.f32 %v272, %v375
    %v400 = vadd.f32 %v273, %v376
    %v401 = vadd.f32 %v274, %v377
    %v402 = vadd.f32 %v275, %v378
    %v403 = vadd.f32 %v276, %v379
    %v404 = vadd.f32 %v277, %v380
    %v405 = vadd.f32 %v278, %v381
    %v406 = vlaneseq
    %v407 = vshrl.u32 %v406, 7
    %v408 = vsub.s32 3, %v407
    %v409 = vrot.slane %v127, %v408
    %v410 = vlaneseq
    %v411 = vshrl.u32 %v410, 7
    %v412 = vsub.s32 3, %v411
    %v413 = vrot.slane %v128, %v412
    %v414 = vmul.f32 %v109, %v409
    %v415 = vmul.f32 %v110, %v413
    %v416 = vmul.f32 %v112, %v409
    %v417 = vmul.f32 %v113, %v413
    %v418 = vmul.f32 %v115, %v409
    %v419 = vmul.f32 %v116, %v413
    %v420 = vmul.f32 %v118, %v409
    %v421 = vmul.f32 %v119, %v413
    %v422 = vmul.f32 %v121, %v409
    %v423 = vmul.f32 %v122, %v413
    %v424 = vmul.f32 %v124, %v409
    %v425 = vmul.f32 %v125, %v413
    %v426 = vlaneseq
    %v427 = vshrl.u32 %v426, 7
    %v428 = vsub.s32 4, %v427
    %v429 = vrot.slane %v127, %v428
    %v430 = vlaneseq
    %v431 = vshrl.u32 %v430, 7
    %v432 = vsub.s32 4, %v431
    %v433 = vrot.slane %v128, %v432
    %436 = vrot.lane.b32.xlu0 %v429, 8
    %v437 = vpop.permute.xlu0 %436
    %438 = vrot.lane.b32.xlu0 %v433, 8
    %v439 = vpop.permute.xlu0 %438
    %v440 = vsel %vm165, %v437, %v439
    %v444 = vmul.f32 %v109, %v437
    %v445 = vmul.f32 %v110, %v440
    %v446 = vmul.f32 %v111, %v439
    %v447 = vmul.f32 %v112, %v437
    %v448 = vmul.f32 %v113, %v440
    %v449 = vmul.f32 %v114, %v439
    %v450 = vmul.f32 %v115, %v437
    %v451 = vmul.f32 %v116, %v440
    %v452 = vmul.f32 %v117, %v439
    %v453 = vmul.f32 %v118, %v437
    %v454 = vmul.f32 %v119, %v440
    %v455 = vmul.f32 %v120, %v439
    %v456 = vmul.f32 %v121, %v437
    %v457 = vmul.f32 %v122, %v440
    %v458 = vmul.f32 %v123, %v439
    %v459 = vmul.f32 %v124, %v437
    %v460 = vmul.f32 %v125, %v440
    %v461 = vmul.f32 %v126, %v439
    %480 = vrot.lane.b32.xlu0 %v444, 120
    %v481 = vpop.permute.xlu0 %480
    %482 = vrot.lane.b32.xlu0 %v445, 120
    %v483 = vpop.permute.xlu0 %482
    %484 = vrot.lane.b32.xlu0 %v446, 120
    %v485 = vpop.permute.xlu0 %484
    %486 = vrot.lane.b32.xlu0 %v447, 120
    %v487 = vpop.permute.xlu0 %486
    %488 = vrot.lane.b32.xlu0 %v448, 120
    %v489 = vpop.permute.xlu0 %488
    %490 = vrot.lane.b32.xlu0 %v449, 120
    %v491 = vpop.permute.xlu0 %490
    %492 = vrot.lane.b32.xlu0 %v450, 120
    %v493 = vpop.permute.xlu0 %492
    %494 = vrot.lane.b32.xlu0 %v451, 120
    %v495 = vpop.permute.xlu0 %494
    %496 = vrot.lane.b32.xlu0 %v452, 120
    %v497 = vpop.permute.xlu0 %496
    %498 = vrot.lane.b32.xlu0 %v453, 120
    %v499 = vpop.permute.xlu0 %498
    %500 = vrot.lane.b32.xlu0 %v454, 120
    %v501 = vpop.permute.xlu0 %500
    %502 = vrot.lane.b32.xlu0 %v455, 120
    %v503 = vpop.permute.xlu0 %502
    %504 = vrot.lane.b32.xlu0 %v456, 120
    %v505 = vpop.permute.xlu0 %504
    %506 = vrot.lane.b32.xlu0 %v457, 120
    %v507 = vpop.permute.xlu0 %506
    %508 = vrot.lane.b32.xlu0 %v458, 120
    %v509 = vpop.permute.xlu0 %508
    %510 = vrot.lane.b32.xlu0 %v459, 120
    %v511 = vpop.permute.xlu0 %510
    %512 = vrot.lane.b32.xlu0 %v460, 120
    %v513 = vpop.permute.xlu0 %512
    %514 = vrot.lane.b32.xlu0 %v461, 120
    %v515 = vpop.permute.xlu0 %514
    %v516 = vsel %vm242, %v481, %v483
    %v517 = vsel %vm242, %v483, %v485
    %v518 = vsel %vm242, %v487, %v489
    %v519 = vsel %vm242, %v489, %v491
    %v520 = vsel %vm242, %v493, %v495
    %v521 = vsel %vm242, %v495, %v497
    %v522 = vsel %vm242, %v499, %v501
    %v523 = vsel %vm242, %v501, %v503
    %v524 = vsel %vm242, %v505, %v507
    %v525 = vsel %vm242, %v507, %v509
    %v526 = vsel %vm242, %v511, %v513
    %v527 = vsel %vm242, %v513, %v515
    %v540 = vadd.f32 %v414, %v516
    %v541 = vadd.f32 %v415, %v517
    %v542 = vadd.f32 %v416, %v518
    %v543 = vadd.f32 %v417, %v519
    %v544 = vadd.f32 %v418, %v520
    %v545 = vadd.f32 %v419, %v521
    %v546 = vadd.f32 %v420, %v522
    %v547 = vadd.f32 %v421, %v523
    %v548 = vadd.f32 %v422, %v524
    %v549 = vadd.f32 %v423, %v525
    %v550 = vadd.f32 %v424, %v526
    %v551 = vadd.f32 %v425, %v527
    %v552 = vlaneseq
    %v553 = vshrl.u32 %v552, 7
    %v554 = vsub.s32 5, %v553
    %v555 = vrot.slane %v127, %v554
    %v556 = vlaneseq
    %v557 = vshrl.u32 %v556, 7
    %v558 = vsub.s32 5, %v557
    %v559 = vrot.slane %v128, %v558
    %562 = vrot.lane.b32.xlu0 %v555, 16
    %v563 = vpop.permute.xlu0 %562
    %564 = vrot.lane.b32.xlu0 %v559, 16
    %v565 = vpop.permute.xlu0 %564
    %v566 = vsel %vm41, %v563, %v565
    %v570 = vmul.f32 %v109, %v563
    %v571 = vmul.f32 %v110, %v566
    %v572 = vmul.f32 %v111, %v565
    %v573 = vmul.f32 %v112, %v563
    %v574 = vmul.f32 %v113, %v566
    %v575 = vmul.f32 %v114, %v565
    %v576 = vmul.f32 %v115, %v563
    %v577 = vmul.f32 %v116, %v566
    %v578 = vmul.f32 %v117, %v565
    %v579 = vmul.f32 %v118, %v563
    %v580 = vmul.f32 %v119, %v566
    %v581 = vmul.f32 %v120, %v565
    %v582 = vmul.f32 %v121, %v563
    %v583 = vmul.f32 %v122, %v566
    %v584 = vmul.f32 %v123, %v565
    %v585 = vmul.f32 %v124, %v563
    %v586 = vmul.f32 %v125, %v566
    %v587 = vmul.f32 %v126, %v565
    %606 = vrot.lane.b32.xlu0 %v570, 112
    %v607 = vpop.permute.xlu0 %606
    %608 = vrot.lane.b32.xlu0 %v571, 112
    %v609 = vpop.permute.xlu0 %608
    %610 = vrot.lane.b32.xlu0 %v572, 112
    %v611 = vpop.permute.xlu0 %610
    %612 = vrot.lane.b32.xlu0 %v573, 112
    %v613 = vpop.permute.xlu0 %612
    %614 = vrot.lane.b32.xlu0 %v574, 112
    %v615 = vpop.permute.xlu0 %614
    %616 = vrot.lane.b32.xlu0 %v575, 112
    %v617 = vpop.permute.xlu0 %616
    %618 = vrot.lane.b32.xlu0 %v576, 112
    %v619 = vpop.permute.xlu0 %618
    %620 = vrot.lane.b32.xlu0 %v577, 112
    %v621 = vpop.permute.xlu0 %620
    %622 = vrot.lane.b32.xlu0 %v578, 112
    %v623 = vpop.permute.xlu0 %622
    %624 = vrot.lane.b32.xlu0 %v579, 112
    %v625 = vpop.permute.xlu0 %624
    %626 = vrot.lane.b32.xlu0 %v580, 112
    %v627 = vpop.permute.xlu0 %626
    %628 = vrot.lane.b32.xlu0 %v581, 112
    %v629 = vpop.permute.xlu0 %628
    %630 = vrot.lane.b32.xlu0 %v582, 112
    %v631 = vpop.permute.xlu0 %630
    %632 = vrot.lane.b32.xlu0 %v583, 112
    %v633 = vpop.permute.xlu0 %632
    %634 = vrot.lane.b32.xlu0 %v584, 112
    %v635 = vpop.permute.xlu0 %634
    %636 = vrot.lane.b32.xlu0 %v585, 112
    %v637 = vpop.permute.xlu0 %636
    %638 = vrot.lane.b32.xlu0 %v586, 112
    %v639 = vpop.permute.xlu0 %638
    %640 = vrot.lane.b32.xlu0 %v587, 112
    %v641 = vpop.permute.xlu0 %640
    %v642 = vsel %vm369, %v607, %v609
    %v643 = vsel %vm369, %v609, %v611
    %v644 = vsel %vm369, %v613, %v615
    %v645 = vsel %vm369, %v615, %v617
    %v646 = vsel %vm369, %v619, %v621
    %v647 = vsel %vm369, %v621, %v623
    %v648 = vsel %vm369, %v625, %v627
    %v649 = vsel %vm369, %v627, %v629
    %v650 = vsel %vm369, %v631, %v633
    %v651 = vsel %vm369, %v633, %v635
    %v652 = vsel %vm369, %v637, %v639
    %v653 = vsel %vm369, %v639, %v641
    %v666 = vadd.f32 %v540, %v642
    %v667 = vadd.f32 %v541, %v643
    %v668 = vadd.f32 %v542, %v644
    %v669 = vadd.f32 %v543, %v645
    %v670 = vadd.f32 %v544, %v646
    %v671 = vadd.f32 %v545, %v647
    %v672 = vadd.f32 %v546, %v648
    %v673 = vadd.f32 %v547, %v649
    %v674 = vadd.f32 %v548, %v650
    %v675 = vadd.f32 %v549, %v651
    %v676 = vadd.f32 %v550, %v652
    %v677 = vadd.f32 %v551, %v653
    %v678 = vlaneseq
    %v679 = vshrl.u32 %v678, 7
    %v680 = vsub.s32 6, %v679
    %v681 = vrot.slane %v127, %v680
    %v682 = vlaneseq
    %v683 = vshrl.u32 %v682, 7
    %v684 = vsub.s32 6, %v683
    %v685 = vrot.slane %v128, %v684
    %v686 = vmul.f32 %v109, %v681
    %v687 = vmul.f32 %v110, %v685
    %v688 = vmul.f32 %v112, %v681
    %v689 = vmul.f32 %v113, %v685
    %v690 = vmul.f32 %v115, %v681
    %v691 = vmul.f32 %v116, %v685
    %v692 = vmul.f32 %v118, %v681
    %v693 = vmul.f32 %v119, %v685
    %v694 = vmul.f32 %v121, %v681
    %v695 = vmul.f32 %v122, %v685
    %v696 = vmul.f32 %v124, %v681
    %v697 = vmul.f32 %v125, %v685
    %v698 = vlaneseq
    %v699 = vshrl.u32 %v698, 7
    %v700 = vsub.s32 7, %v699
    %v701 = vrot.slane %v127, %v700
    %v702 = vlaneseq
    %v703 = vshrl.u32 %v702, 7
    %v704 = vsub.s32 7, %v703
    %v705 = vrot.slane %v128, %v704
    %708 = vrot.lane.b32.xlu0 %v701, 8
    %v709 = vpop.permute.xlu0 %708
    %710 = vrot.lane.b32.xlu0 %v705, 8
    %v711 = vpop.permute.xlu0 %710
    %v712 = vsel %vm165, %v709, %v711
    %v716 = vmul.f32 %v109, %v709
    %v717 = vmul.f32 %v110, %v712
    %v718 = vmul.f32 %v111, %v711
    %v719 = vmul.f32 %v112, %v709
    %v720 = vmul.f32 %v113, %v712
    %v721 = vmul.f32 %v114, %v711
    %v722 = vmul.f32 %v115, %v709
    %v723 = vmul.f32 %v116, %v712
    %v724 = vmul.f32 %v117, %v711
    %v725 = vmul.f32 %v118, %v709
    %v726 = vmul.f32 %v119, %v712
    %v727 = vmul.f32 %v120, %v711
    %v728 = vmul.f32 %v121, %v709
    %v729 = vmul.f32 %v122, %v712
    %v730 = vmul.f32 %v123, %v711
    %v731 = vmul.f32 %v124, %v709
    %v732 = vmul.f32 %v125, %v712
    %v733 = vmul.f32 %v126, %v711
    %752 = vrot.lane.b32.xlu0 %v716, 120
    %v753 = vpop.permute.xlu0 %752
    %754 = vrot.lane.b32.xlu0 %v717, 120
    %v755 = vpop.permute.xlu0 %754
    %756 = vrot.lane.b32.xlu0 %v718, 120
    %v757 = vpop.permute.xlu0 %756
    %758 = vrot.lane.b32.xlu0 %v719, 120
    %v759 = vpop.permute.xlu0 %758
    %760 = vrot.lane.b32.xlu0 %v720, 120
    %v761 = vpop.permute.xlu0 %760
    %762 = vrot.lane.b32.xlu0 %v721, 120
    %v763 = vpop.permute.xlu0 %762
    %764 = vrot.lane.b32.xlu0 %v722, 120
    %v765 = vpop.permute.xlu0 %764
    %766 = vrot.lane.b32.xlu0 %v723, 120
    %v767 = vpop.permute.xlu0 %766
    %768 = vrot.lane.b32.xlu0 %v724, 120
    %v769 = vpop.permute.xlu0 %768
    %770 = vrot.lane.b32.xlu0 %v725, 120
    %v771 = vpop.permute.xlu0 %770
    %772 = vrot.lane.b32.xlu0 %v726, 120
    %v773 = vpop.permute.xlu0 %772
    %774 = vrot.lane.b32.xlu0 %v727, 120
    %v775 = vpop.permute.xlu0 %774
    %776 = vrot.lane.b32.xlu0 %v728, 120
    %v777 = vpop.permute.xlu0 %776
    %778 = vrot.lane.b32.xlu0 %v729, 120
    %v779 = vpop.permute.xlu0 %778
    %780 = vrot.lane.b32.xlu0 %v730, 120
    %v781 = vpop.permute.xlu0 %780
    %782 = vrot.lane.b32.xlu0 %v731, 120
    %v783 = vpop.permute.xlu0 %782
    %784 = vrot.lane.b32.xlu0 %v732, 120
    %v785 = vpop.permute.xlu0 %784
    %786 = vrot.lane.b32.xlu0 %v733, 120
    %v787 = vpop.permute.xlu0 %786
    %v788 = vsel %vm242, %v753, %v755
    %v789 = vsel %vm242, %v755, %v757
    %v790 = vsel %vm242, %v759, %v761
    %v791 = vsel %vm242, %v761, %v763
    %v792 = vsel %vm242, %v765, %v767
    %v793 = vsel %vm242, %v767, %v769
    %v794 = vsel %vm242, %v771, %v773
    %v795 = vsel %vm242, %v773, %v775
    %v796 = vsel %vm242, %v777, %v779
    %v797 = vsel %vm242, %v779, %v781
    %v798 = vsel %vm242, %v783, %v785
    %v799 = vsel %vm242, %v785, %v787
    %v812 = vadd.f32 %v686, %v788
    %v813 = vadd.f32 %v687, %v789
    %v814 = vadd.f32 %v688, %v790
    %v815 = vadd.f32 %v689, %v791
    %v816 = vadd.f32 %v690, %v792
    %v817 = vadd.f32 %v691, %v793
    %v818 = vadd.f32 %v692, %v794
    %v819 = vadd.f32 %v693, %v795
    %v820 = vadd.f32 %v694, %v796
    %v821 = vadd.f32 %v695, %v797
    %v822 = vadd.f32 %v696, %v798
    %v823 = vadd.f32 %v697, %v799
    %v824 = vlaneseq
    %v825 = vshrl.u32 %v824, 7
    %v826 = vsub.s32 0, %v825
    %v827 = vrot.slane %v129, %v826
    %v828 = vlaneseq
    %v829 = vshrl.u32 %v828, 7
    %v830 = vsub.s32 0, %v829
    %v831 = vrot.slane %v130, %v830
    %834 = vrot.lane.b32.xlu0 %v827, 16
    %v835 = vpop.permute.xlu0 %834
    %836 = vrot.lane.b32.xlu0 %v831, 16
    %v837 = vpop.permute.xlu0 %836
    %v838 = vsel %vm41, %v835, %v837
    %v842 = vmul.f32 %v109, %v835
    %v843 = vmul.f32 %v110, %v838
    %v844 = vmul.f32 %v111, %v837
    %v845 = vmul.f32 %v112, %v835
    %v846 = vmul.f32 %v113, %v838
    %v847 = vmul.f32 %v114, %v837
    %v848 = vmul.f32 %v115, %v835
    %v849 = vmul.f32 %v116, %v838
    %v850 = vmul.f32 %v117, %v837
    %v851 = vmul.f32 %v118, %v835
    %v852 = vmul.f32 %v119, %v838
    %v853 = vmul.f32 %v120, %v837
    %v854 = vmul.f32 %v121, %v835
    %v855 = vmul.f32 %v122, %v838
    %v856 = vmul.f32 %v123, %v837
    %v857 = vmul.f32 %v124, %v835
    %v858 = vmul.f32 %v125, %v838
    %v859 = vmul.f32 %v126, %v837
    %878 = vrot.lane.b32.xlu0 %v842, 112
    %v879 = vpop.permute.xlu0 %878
    %880 = vrot.lane.b32.xlu0 %v843, 112
    %v881 = vpop.permute.xlu0 %880
    %882 = vrot.lane.b32.xlu0 %v844, 112
    %v883 = vpop.permute.xlu0 %882
    %884 = vrot.lane.b32.xlu0 %v845, 112
    %v885 = vpop.permute.xlu0 %884
    %886 = vrot.lane.b32.xlu0 %v846, 112
    %v887 = vpop.permute.xlu0 %886
    %888 = vrot.lane.b32.xlu0 %v847, 112
    %v889 = vpop.permute.xlu0 %888
    %890 = vrot.lane.b32.xlu0 %v848, 112
    %v891 = vpop.permute.xlu0 %890
    %892 = vrot.lane.b32.xlu0 %v849, 112
    %v893 = vpop.permute.xlu0 %892
    %894 = vrot.lane.b32.xlu0 %v850, 112
    %v895 = vpop.permute.xlu0 %894
    %896 = vrot.lane.b32.xlu0 %v851, 112
    %v897 = vpop.permute.xlu0 %896
    %898 = vrot.lane.b32.xlu0 %v852, 112
    %v899 = vpop.permute.xlu0 %898
    %900 = vrot.lane.b32.xlu0 %v853, 112
    %v901 = vpop.permute.xlu0 %900
    %902 = vrot.lane.b32.xlu0 %v854, 112
    %v903 = vpop.permute.xlu0 %902
    %904 = vrot.lane.b32.xlu0 %v855, 112
    %v905 = vpop.permute.xlu0 %904
    %906 = vrot.lane.b32.xlu0 %v856, 112
    %v907 = vpop.permute.xlu0 %906
    %908 = vrot.lane.b32.xlu0 %v857, 112
    %v909 = vpop.permute.xlu0 %908
    %910 = vrot.lane.b32.xlu0 %v858, 112
    %v911 = vpop.permute.xlu0 %910
    %912 = vrot.lane.b32.xlu0 %v859, 112
    %v913 = vpop.permute.xlu0 %912
    %v914 = vsel %vm369, %v879, %v881
    %v915 = vsel %vm369, %v881, %v883
    %v916 = vsel %vm369, %v885, %v887
    %v917 = vsel %vm369, %v887, %v889
    %v918 = vsel %vm369, %v891, %v893
    %v919 = vsel %vm369, %v893, %v895
    %v920 = vsel %vm369, %v897, %v899
    %v921 = vsel %vm369, %v899, %v901
    %v922 = vsel %vm369, %v903, %v905
    %v923 = vsel %vm369, %v905, %v907
    %v924 = vsel %vm369, %v909, %v911
    %v925 = vsel %vm369, %v911, %v913
    %v938 = vadd.f32 %v812, %v914
    %v939 = vadd.f32 %v813, %v915
    %v940 = vadd.f32 %v814, %v916
    %v941 = vadd.f32 %v815, %v917
    %v942 = vadd.f32 %v816, %v918
    %v943 = vadd.f32 %v817, %v919
    %v944 = vadd.f32 %v818, %v920
    %v945 = vadd.f32 %v819, %v921
    %v946 = vadd.f32 %v820, %v922
    %v947 = vadd.f32 %v821, %v923
    %v948 = vadd.f32 %v822, %v924
    %v949 = vadd.f32 %v823, %v925
    %vm962 = vcmask 1046528
    %v963 = vrot.slane %v666, 1
    %v964 = vrot.slane %v668, 1
    %v965 = vsel %vm962, %v963, %v964
    %v966 = vrot.slane %v667, 1
    %v967 = vrot.slane %v669, 1
    %v968 = vsel %vm962, %v966, %v967
    %v969 = vrot.slane %v670, 1
    %v970 = vsel %vm962, %v964, %v969
    %v971 = vrot.slane %v671, 1
    %v972 = vsel %vm962, %v967, %v971
    %v973 = vrot.slane %v672, 1
    %v974 = vrot.slane %v674, 1
    %v975 = vsel %vm962, %v973, %v974
    %v976 = vrot.slane %v673, 1
    %v977 = vrot.slane %v675, 1
    %v978 = vsel %vm962, %v976, %v977
    %v979 = vrot.slane %v676, 1
    %v980 = vsel %vm962, %v974, %v979
    %v981 = vrot.slane %v677, 1
    %v982 = vsel %vm962, %v977, %v981
    %v995 = vadd.f32 %v394, %v965
    %v996 = vadd.f32 %v395, %v968
    %v997 = vadd.f32 %v396, %v970
    %v998 = vadd.f32 %v397, %v972
    %v999 = vadd.f32 %v398, %v969
    %v1000 = vadd.f32 %v399, %v971
    %v1001 = vadd.f32 %v400, %v975
    %v1002 = vadd.f32 %v401, %v978
    %v1003 = vadd.f32 %v402, %v980
    %v1004 = vadd.f32 %v403, %v982
    %v1005 = vadd.f32 %v404, %v979
    %v1006 = vadd.f32 %v405, %v981
    %vm1019 = vcmask 1045504
    %v1020 = vrot.slane %v938, 2
    %v1021 = vrot.slane %v940, 2
    %v1022 = vsel %vm1019, %v1020, %v1021
    %v1023 = vrot.slane %v939, 2
    %v1024 = vrot.slane %v941, 2
    %v1025 = vsel %vm1019, %v1023, %v1024
    %v1026 = vrot.slane %v942, 2
    %v1027 = vsel %vm1019, %v1021, %v1026
    %v1028 = vrot.slane %v943, 2
    %v1029 = vsel %vm1019, %v1024, %v1028
    %v1030 = vrot.slane %v944, 2
    %v1031 = vrot.slane %v946, 2
    %v1032 = vsel %vm1019, %v1030, %v1031
    %v1033 = vrot.slane %v945, 2
    %v1034 = vrot.slane %v947, 2
    %v1035 = vsel %vm1019, %v1033, %v1034
    %v1036 = vrot.slane %v948, 2
    %v1037 = vsel %vm1019, %v1031, %v1036
    %v1038 = vrot.slane %v949, 2
    %v1039 = vsel %vm1019, %v1034, %v1038
    %v1052 = vadd.f32 %v995, %v1022
    %v1053 = vadd.f32 %v996, %v1025
    %v1054 = vadd.f32 %v997, %v1027
    %v1055 = vadd.f32 %v998, %v1029
    %v1056 = vadd.f32 %v999, %v1026
    %v1057 = vadd.f32 %v1000, %v1028
    %v1058 = vadd.f32 %v1001, %v1032
    %v1059 = vadd.f32 %v1002, %v1035
    %v1060 = vadd.f32 %v1003, %v1037
    %v1061 = vadd.f32 %v1004, %v1039
    %v1062 = vadd.f32 %v1005, %v1036
    %v1063 = vadd.f32 %v1006, %v1038
    %vm1064 = vcmp.gt.f32.partialorder %v1052, 0.0
    %vm1065 = vcmp.gt.f32.partialorder %v1053, 0.0
    %vm1066 = vcmp.gt.f32.partialorder %v1054, 0.0
    %vm1067 = vcmp.gt.f32.partialorder %v1055, 0.0
    %vm1068 = vcmp.gt.f32.partialorder %v1056, 0.0
    %vm1069 = vcmp.gt.f32.partialorder %v1057, 0.0
    %vm1070 = vcmp.gt.f32.partialorder %v1058, 0.0
    %vm1071 = vcmp.gt.f32.partialorder %v1059, 0.0
    %vm1072 = vcmp.gt.f32.partialorder %v1060, 0.0
    %vm1073 = vcmp.gt.f32.partialorder %v1061, 0.0
    %vm1074 = vcmp.gt.f32.partialorder %v1062, 0.0
    %vm1075 = vcmp.gt.f32.partialorder %v1063, 0.0
    %v1076 = vmul.f32 %v1052, 0.135
    %v1077 = vmul.f32 %v1053, 0.135
    %v1078 = vmul.f32 %v1054, 0.135
    %v1079 = vmul.f32 %v1055, 0.135
    %v1080 = vmul.f32 %v1056, 0.135
    %v1081 = vmul.f32 %v1057, 0.135
    %v1082 = vmul.f32 %v1058, 0.135
    %v1083 = vmul.f32 %v1059, 0.135
    %v1084 = vmul.f32 %v1060, 0.135
    %v1085 = vmul.f32 %v1061, 0.135
    %v1086 = vmul.f32 %v1062, 0.135
    %v1087 = vmul.f32 %v1063, 0.135
    %v1088 = vsel %vm1064, %v1052, %v1076
    %v1089 = vsel %vm1065, %v1053, %v1077
    %v1090 = vsel %vm1066, %v1054, %v1078
    %v1091 = vsel %vm1067, %v1055, %v1079
    %v1092 = vsel %vm1068, %v1056, %v1080
    %v1093 = vsel %vm1069, %v1057, %v1081
    %v1094 = vsel %vm1070, %v1058, %v1082
    %v1095 = vsel %vm1071, %v1059, %v1083
    %v1096 = vsel %vm1072, %v1060, %v1084
    %v1097 = vsel %vm1073, %v1061, %v1085
    %v1098 = vsel %vm1074, %v1062, %v1086
    %v1099 = vsel %vm1075, %v1063, %v1087
    %1100 = vst [vmem:[%s2] sm:$0xff] %v1088
    %1101 = vst [vmem:[%s2 + $0x8] sm:$0xff] %v1089
    %1102 = vst [vmem:[%s2 + $0x10] sm:$0xff] %v1090
    %1103 = vst [vmem:[%s2 + $0x18] sm:$0xff] %v1091
    %1104 = vst [vmem:[%s2 + $0x20] sm:$0x3] %v1092
    %1105 = vst [vmem:[%s2 + $0x28] sm:$0x3] %v1093
    %1106 = vst [vmem:[%s2 + $0x30] sm:$0xff] %v1094
    %1107 = vst [vmem:[%s2 + $0x38] sm:$0xff] %v1095
    %1108 = vst [vmem:[%s2 + $0x40] sm:$0xff] %v1096
    %1109 = vst [vmem:[%s2 + $0x48] sm:$0xff] %v1097
    %1110 = vst [vmem:[%s2 + $0x50] sm:$0x3] %v1098
    %1111 = vst [vmem:[%s2 + $0x58] sm:$0x3] %v1099
    // Predicated region
    $region18: #{tpu_custom_call.1} parent=1 // pred_check
      _
    $region19: #{tpu_custom_call.1} parent=1 // pred_check_branch
      %1113 = sbr.rel (0) target = $region21
    $region20: #{tpu_custom_call.1} parent=1 // pred_region
      _
    $region21: #{tpu_custom_call.1} parent=1 // pred_fallthru
      _
    // Predicated region
    $region22: #{tpu_custom_call.1} parent=1 // pred_check
      _
    $region23: #{tpu_custom_call.1} parent=1 // pred_check_branch
      %1115 = sbr.rel (0) target = $region25
    $region24: #{tpu_custom_call.1} parent=1 // pred_region
      _
    $region25: #{tpu_custom_call.1} parent=1 // pred_fallthru
      _
    %1116 = vsyncpa [#allocation4], 1
    %1117 = vsyncpa [#allocation6], 1

</llo_original>
